<compile_context>
chip_gen: v6e
topology: v6e:2x2x1
jax: 0.10.0
libtpu: 0.0.40
codegen_flags: <defaults>
</compile_context>

<pallas_src>
import math
import functools

import jax
import jax.numpy as jnp
from jax import lax
from jax.experimental import pallas as pl
from jax.experimental.pallas import tpu as pltpu


def _bond_encoder_kernel(idx_ref, tab_ref, out_ref, *, num_feat, vstride, chunk):
    # idx_ref: (F, TN)        int32   -- edge features, edges on lanes
    # tab_ref: (E, F*vstride) f32/bf16-- stacked per-feature tables, transposed
    # out_ref: (E, TN)        f32     -- lane-dense output tile
    tab_t = tab_ref[...]                       # tiny, loaded once per tile
    tile_n = out_ref.shape[1]
    n_chunks = tile_n // chunk

    # Hoisted once per tile; shared by every feature band and every chunk.
    iota_band = lax.broadcasted_iota(jnp.int32, (vstride, chunk), 0)

    def do_chunk(start):
        bands = []
        for f in range(num_feat):                              # static loop
            # Load-side (1, chunk) row slice; broadcast across the 8-row band
            # happens inside the compare (1 vreg of work per feature/chunk).
            row = idx_ref[pl.ds(f, 1), pl.ds(start, chunk)]    # (1, chunk)
            bands.append((row == iota_band).astype(tab_t.dtype))
        # Sublane-aligned (vstride == 8) bands: concat is pure vreg layout.
        fhot = jnp.concatenate(bands, axis=0)                  # (F*vstride, chunk)
        # One fused MXU matmul per chunk: (E, F*8) @ (F*8, chunk) -> (E, chunk)
        out_ref[:, pl.ds(start, chunk)] = jnp.dot(
            tab_t, fhot, preferred_element_type=jnp.float32
        ).astype(out_ref.dtype)

    if n_chunks <= 8:
        # Small, fixed trip count: static unroll gives the scheduler full view.
        for c in range(n_chunks):
            do_chunk(c * chunk)
    else:
        # Large tiles (v6e/v5e single-core path): bound vreg live ranges.
        def body(c, carry):
            do_chunk(pl.multiple_of(c * chunk, 128))
            return carry
        lax.fori_loop(0, n_chunks, body, 0)


def bond_encoder(edge_attr, tables_t, vstride, *, tile_n=256, chunk=512):
    """edge_attr: (N, F) int32, tables_t: (E, F*vstride) -> (E, N) float32.

    NOTE: output is returned in the lane-dense (E, N) layout; the downstream
    consumer should use it directly (swap its matmul dims) instead of paying
    for a separate transpose.
    """
    n, num_feat = edge_attr.shape
    emb_dim, fvp = tables_t.shape
    assert fvp == num_feat * vstride, "tables_t must be (E, F*vstride)"

    tile_n = min(tile_n, n)
    chunk = min(chunk, tile_n)
    assert n % tile_n == 0, "pad N to a multiple of tile_n"
    assert tile_n % chunk == 0 and chunk % 128 == 0

    # Layout plumbing: edges onto lanes.  (N, F) int32 is ~4 B/edge/feature,
    # so this transpose is negligible; the expensive output transpose is gone.
    idx_t = edge_attr.T.astype(jnp.int32)                      # (F, N)

    kernel = functools.partial(
        _bond_encoder_kernel, num_feat=num_feat, vstride=vstride, chunk=chunk)

    out_en = pl.pallas_call(
        kernel,
        out_shape=jax.ShapeDtypeStruct((emb_dim, n), jnp.float32),
        grid_spec=pltpu.PrefetchScalarGridSpec(
            num_scalar_prefetch=0,
            # >= 4 steps per TensorCore on v7x with the demo shapes (grid=8);
            # raise tile_n on single-core v5e/v6e to amortize per-step overhead.
            grid=(n // tile_n,),
            in_specs=[
                pl.BlockSpec((num_feat, tile_n), lambda i: (0, i)),
                # Constant (E, F*vstride) table; ~3 KiB here, so the default
                # double-buffering is fine (pl.Buffered(1)/VMEM staging only
                # becomes worthwhile if vocab/emb_dim grow).
                pl.BlockSpec((emb_dim, fvp), lambda i: (0, 0)),
            ],
            out_specs=pl.BlockSpec((emb_dim, tile_n), lambda i: (0, i)),
        ),
        compiler_params=pltpu.CompilerParams(
            dimension_semantics=("parallel",)),
    )(idx_t, tables_t)

    return out_en                                              # (E, N)


def make_tables(key, bond_dim, emb_dim, dtype=jnp.float32):
    """Xavier-uniform per-feature tables, stacked in sublane-aligned bands.

    Returns (tables_t, vstride) with tables_t: (E, F*vstride) where
    vstride = ceil(max_vocab / 8) * 8 and column f*vstride + v holds
    table_f[v, :]; rows [vocab_f, vstride) of each band are zero.
    """
    vmax = max(d + 1 for d in bond_dim)
    vstride = ((vmax + 7) // 8) * 8            # sublane-aligned per-feature band
    rows = []
    for i, d in enumerate(bond_dim):
        vocab = d + 1                                          # +1 padding idx
        k = jax.random.fold_in(key, i)
        bound = math.sqrt(6.0 / (vocab + emb_dim))
        w = jax.random.uniform(k, (vocab, emb_dim), jnp.float32,
                               minval=-bound, maxval=bound)
        w = jnp.pad(w, ((0, vstride - vocab), (0, 0)))         # zero-pad band
        rows.append(w)
    combined = jnp.concatenate(rows, axis=0)                   # (F*vstride, E)
    return combined.T.astype(dtype), vstride                   # (E, F*vstride)


if __name__ == "__main__":
    key = jax.random.PRNGKey(0)
    emb_dim = 32
    bond_dim = (5, 6, 2)          # 3 integer bond features, small vocabularies
    n_edges = 2048                # grid of 8 tiles of 256 edges

    tables_t, vstride = make_tables(key, bond_dim, emb_dim)    # (32, 24), 8

    # Integer edge attributes; feature i takes values in [0, bond_dim[i]].
    cols = []
    for i, d in enumerate(bond_dim):
        kc = jax.random.fold_in(jax.random.fold_in(key, 100), i)
        cols.append(jax.random.randint(kc, (n_edges,), 0, d + 1, jnp.int32))
    edge_attr = jnp.stack(cols, axis=1)                        # (N, F) int32

    out = bond_encoder(edge_attr, tables_t, vstride)           # (E, N) lane-dense
    out = jax.block_until_ready(out)

    # Pure-JAX reference (plain gather on the combined table + sum).
    table_full = tables_t.T.astype(jnp.float32)                # (F*vstride, E)
    ref = jnp.zeros((n_edges, emb_dim), jnp.float32)
    for f in range(edge_attr.shape[1]):
        ref = ref + jnp.take(table_full, edge_attr[:, f] + f * vstride, axis=0)

    assert out.shape == (emb_dim, n_edges)
    assert jnp.allclose(out, ref.T, atol=1e-5, rtol=1e-5)
    print("KERNEL_OK")
</pallas_src>

<mosaic_0001>
module attributes {stable_mosaic.version = 11 : i64} {
  func.func @_bond_encoder_kernel(%arg0: i32, %arg1: memref<3x256xi32, #tpu.memory_space<vmem>>, %arg2: memref<32x24xf32, #tpu.memory_space<vmem>>, %arg3: memref<32x256xf32, #tpu.memory_space<vmem>>) attributes {dimension_semantics = [#tpu.dimension_semantics<parallel>], iteration_bounds = array<i64: 8>, scalar_prefetch = 0 : i64, scratch_operands = 0 : i64, tpu.core_type = #tpu.core_type<tc>, window_params = [{transform_indices = @transform_0, window_bounds = array<i64: 3, 256>}, {pipeline_mode = #tpu.pipeline_mode<synchronous>, transform_indices = @transform_1, window_bounds = array<i64: 32, 24>}, {transform_indices = @transform_2, window_bounds = array<i64: 32, 256>}]} {
    %c0 = arith.constant 0 : index
    %c0_0 = arith.constant 0 : index
    %0 = vector.load %arg2[%c0, %c0_0] : memref<32x24xf32, #tpu.memory_space<vmem>>, vector<32x24xf32>
    %1 = tpu.iota {dimensions = array<i32: 0>} : vector<8x256xi32>
    %c0_1 = arith.constant 0 : index
    %c0_2 = arith.constant 0 : index
    %2 = vector.load %arg1[%c0_1, %c0_2] : memref<3x256xi32, #tpu.memory_space<vmem>>, vector<1x256xi32>
    %3 = vector.broadcast %2 : vector<1x256xi32> to vector<8x256xi32>
    %4 = arith.cmpi eq, %3, %1 : vector<8x256xi32>
    %5 = arith.extui %4 : vector<8x256xi1> to vector<8x256xi32>
    %6 = arith.sitofp %5 : vector<8x256xi32> to vector<8x256xf32>
    %c1 = arith.constant 1 : index
    %c0_3 = arith.constant 0 : index
    %7 = vector.load %arg1[%c1, %c0_3] : memref<3x256xi32, #tpu.memory_space<vmem>>, vector<1x256xi32>
    %8 = vector.broadcast %7 : vector<1x256xi32> to vector<8x256xi32>
    %9 = arith.cmpi eq, %8, %1 : vector<8x256xi32>
    %10 = arith.extui %9 : vector<8x256xi1> to vector<8x256xi32>
    %11 = arith.sitofp %10 : vector<8x256xi32> to vector<8x256xf32>
    %c2 = arith.constant 2 : index
    %c0_4 = arith.constant 0 : index
    %12 = vector.load %arg1[%c2, %c0_4] : memref<3x256xi32, #tpu.memory_space<vmem>>, vector<1x256xi32>
    %13 = vector.broadcast %12 : vector<1x256xi32> to vector<8x256xi32>
    %14 = arith.cmpi eq, %13, %1 : vector<8x256xi32>
    %15 = arith.extui %14 : vector<8x256xi1> to vector<8x256xi32>
    %16 = arith.sitofp %15 : vector<8x256xi32> to vector<8x256xf32>
    %17 = tpu.concatenate %6, %11, %16 in 0 : vector<8x256xf32>, vector<8x256xf32>, vector<8x256xf32> -> vector<24x256xf32>
    %cst = arith.constant dense<0.000000e+00> : vector<32x256xf32>
    %18 = tpu.matmul %0, %17, %cst {dimension_numbers = #tpu.dot_dimension_numbers<[1], [0], [0], [1], [0, 0, 1, 1], [], []>} : vector<32x24xf32>, vector<24x256xf32>, vector<32x256xf32> -> vector<32x256xf32>
    %c0_5 = arith.constant 0 : index
    %c0_6 = arith.constant 0 : index
    %19 = vector.load %arg3[%c0_5, %c0_6] : memref<32x256xf32, #tpu.memory_space<vmem>>, vector<32x256xf32>
    tpu.vector_store %arg3[%c0_5, %c0_6], %18 {strides = array<i32>} : memref<32x256xf32, #tpu.memory_space<vmem>>, vector<32x256xf32>,
    return
  }
  func.func @transform_0(%arg0: i32) -> (i32, i32) {
    %c0_i32 = arith.constant 0 : i32
    %c0_i32_0 = arith.constant 0 : i32
    return %c0_i32, %arg0 : i32, i32
  }
  func.func @transform_1(%arg0: i32) -> (i32, i32) {
    %c0_i32 = arith.constant 0 : i32
    %c0_i32_0 = arith.constant 0 : i32
    %c0_i32_1 = arith.constant 0 : i32
    return %c0_i32, %c0_i32_0 : i32, i32
  }
  func.func @transform_2(%arg0: i32) -> (i32, i32) {
    %c0_i32 = arith.constant 0 : i32
    %c0_i32_0 = arith.constant 0 : i32
    return %c0_i32, %arg0 : i32, i32
  }
}

</mosaic_0001>

<llo_original>
// kernel: tpu_custom_call.1
$region0: #{tpu_custom_call.1}
  #allocation0 [shape = 'u32[]', space=smem, size = 0x4, offset = 0x4, fixed_abs, tag = 'smem constant byte address 0x4 - core index']
  #allocation1 [shape = 'u32[144,128]{1,0:T(1,128)}', space=vmem, size = 0x12000, scoped, tag = 'internal scratch']
  %s0 = inlined_call_operand.hbm [shape: s32[3,2048], index: 0, kind: input, shape index: {}]
  %s1 = inlined_call_operand.vmem [shape: f32[32,24], index: 1, kind: input, shape index: {}]
  %s2 = inlined_call_operand.hbm [shape: f32[32,2048], index: 2, kind: output, shape index: {}]
  %s3 = sld [smem:[#allocation0]]
  $region45: #{tpu_custom_call.1} parent=0
    _
  %s5 = ssub.s32 1, %s3
  %s6 = scalar_select 0, %s5, %s3
  $region1: #{tpu_custom_call.1} parent=0
    #allocation2 [shape = 'u8[8192]{0}', space=vmem, size = 0x2000, scoped, tag = 'input window, operand 0']
    #allocation3 [shape = 's32[2]{0}', space=sflag, size = 0x8, scoped, tag = 'scoped memory for tpu_custom_call.1']
    #allocation4 [shape = 's32[2]{0}', space=sflag, size = 0x8, scoped, tag = 'scoped memory for tpu_custom_call.1']
    #allocation5 [shape = 'u8[65536]{0}', space=vmem, size = 0x10000, scoped, tag = 'output window, operand 0']
    %7 = vsyncpa [#allocation3], 0
    %s8 = scalar_lea.sflag [#allocation3], 1
    %9 = vsyncpa %s8, 0
    %10 = vsyncpa [#allocation4], 0
    %s11 = scalar_lea.sflag [#allocation4], 1
    %12 = vsyncpa %s11, 0
    loop: start=0, step=1, limit=10
    $region2: #{tpu_custom_call.1} parent=1 // loop_pre_header
      _
    $region3: #{tpu_custom_call.1} parent=1 // loop_header
      %s14 = sphi 0, %s18
      %p15 = scmp.ge.s32.totalorder %s14, 10
      %s24 = sphi 0, %s26
      %s27 = sphi 0, %s24
      %s28 = sphi 0, %s27
      %s44 = sphi 0, %s28
      %s48 = sphi 0, %s48
      %s50 = sphi 0, %s48
      %s51 = sphi 0, %s50
      %s65 = sphi 0, %s51
      %s71 = sphi 0, %s73
      %s74 = sphi 0, %s71
      %s75 = sphi 0, %s74
      %s91 = sphi 0, %s75
    $region4: #{tpu_custom_call.1} parent=1 // loop_header_branch
      %17 = sbr.rel (%p15) target = $region8
    $region5: #{tpu_custom_call.1} parent=1 // loop_body
      %s19 = ssub.s32 %s14, 1
      %s20 = ssub.s32 %s14, 2
      %s21 = sadd.s32 %s14, 1
      %s22 = ssub.s32 %s14, %s21
      %p23 = scmp.eq.s32.totalorder %s22, 0
      %s25 = sadd.s32 %s24, 1
      %s26 = scalar_select %p23, %s24, %s25
      %p29 = pneg %p23
      %p30 = scmp.eq.s32.totalorder %s14, 7
      %p31 = por %p29, %p30
      %p32 = scmp.ne.s32.totalorder %s24, %s27
      %p33 = scmp.eq.s32.totalorder %s14, 0
      %p34 = por %p32, %p33
      %p35 = scmp.ne.s32.totalorder %s24, %s27
      %p36 = scmp.eq.s32.totalorder %s19, 7
      %p37 = por %p35, %p36
      %p38 = scmp.ne.s32.totalorder %s27, %s28
      %p39 = scmp.eq.s32.totalorder %s19, 0
      %p40 = por %p38, %p39
      %p41 = scmp.ne.s32.totalorder %s27, %s28
      %p42 = scmp.eq.s32.totalorder %s20, 7
      %p43 = por %p41, %p42
      %p45 = scmp.ne.s32.totalorder %s28, %s44
      %p46 = scmp.eq.s32.totalorder %s20, 0
      %p47 = por %p45, %p46
      %s49 = sadd.s32 %s48, 1
      %p52 = scmp.eq.s32.totalorder %s14, 7
      %p53 = scmp.ne.s32.totalorder %s48, %s50
      %p54 = scmp.eq.s32.totalorder %s14, 0
      %p55 = por %p53, %p54
      %p56 = scmp.ne.s32.totalorder %s48, %s50
      %p57 = scmp.eq.s32.totalorder %s19, 7
      %p58 = por %p56, %p57
      %p59 = scmp.ne.s32.totalorder %s50, %s51
      %p60 = scmp.eq.s32.totalorder %s19, 0
      %p61 = por %p59, %p60
      %p62 = scmp.ne.s32.totalorder %s50, %s51
      %p63 = scmp.eq.s32.totalorder %s20, 7
      %p64 = por %p62, %p63
      %p66 = scmp.ne.s32.totalorder %s51, %s65
      %p67 = scmp.eq.s32.totalorder %s20, 0
      %p68 = por %p66, %p67
      %s69 = ssub.s32 %s14, %s21
      %p70 = scmp.eq.s32.totalorder %s69, 0
      %s72 = sadd.s32 %s71, 1
      %s73 = scalar_select %p70, %s71, %s72
      %p76 = pneg %p70
      %p77 = scmp.eq.s32.totalorder %s14, 7
      %p78 = por %p76, %p77
      %p79 = scmp.ne.s32.totalorder %s71, %s74
      %p80 = scmp.eq.s32.totalorder %s14, 0
      %p81 = por %p79, %p80
      %p82 = scmp.ne.s32.totalorder %s71, %s74
      %p83 = scmp.eq.s32.totalorder %s19, 7
      %p84 = por %p82, %p83
      %p85 = scmp.ne.s32.totalorder %s74, %s75
      %p86 = scmp.eq.s32.totalorder %s19, 0
      %p87 = por %p85, %p86
      %p88 = scmp.ne.s32.totalorder %s74, %s75
      %p89 = scmp.eq.s32.totalorder %s20, 7
      %p90 = por %p88, %p89
      %p92 = scmp.ne.s32.totalorder %s75, %s91
      %p93 = scmp.eq.s32.totalorder %s20, 0
      %p94 = por %p92, %p93
      %p95 = scmp.le.s32.totalorder 1, %s14
      %p96 = scmp.lt.s32.totalorder %s14, 9
      %p97 = pnand %p95, %p96
      %p98 = pneg %p97
      // Predicated region
      $region9: #{tpu_custom_call.1} parent=5 // pred_check
        _
      $region10: #{tpu_custom_call.1} parent=5 // pred_check_branch
        %100 = sbr.rel (%p97) target = $region12
      $region11: #{tpu_custom_call.1} parent=5 // pred_region
        %s101 = ssub.s32 %s14, 1
        // Predicated region
        $region13: #{tpu_custom_call.1} parent=11 // pred_check
          %p102 = pneg %p61
        $region14: #{tpu_custom_call.1} parent=11 // pred_check_branch
          %104 = sbr.rel (%p102) target = $region16
        $region15: #{tpu_custom_call.1} parent=11 // pred_region
          _
        $region16: #{tpu_custom_call.1} parent=11 // pred_fallthru
          _
      $region12: #{tpu_custom_call.1} parent=5 // pred_fallthru
        _
      %p105 = scmp.lt.s32.totalorder %s14, 8
      // Predicated region
      $region17: #{tpu_custom_call.1} parent=5 // pred_check
        %p106 = pneg %p105
      $region18: #{tpu_custom_call.1} parent=5 // pred_check_branch
        %108 = sbr.rel (%p106) target = $region20
      $region19: #{tpu_custom_call.1} parent=5 // pred_region
        // Predicated region
        $region21: #{tpu_custom_call.1} parent=19 // pred_check
          %p109 = pneg %p34
        $region22: #{tpu_custom_call.1} parent=19 // pred_check_branch
          %111 = sbr.rel (%p109) target = $region24
        $region23: #{tpu_custom_call.1} parent=19 // pred_region
          %s112 = sand.u32 %s24, 1
          %s113 = scalar_lea.sflag [#allocation3], %s112
          %s114 = sand.u32 %s24, 1
          %s115 = smul.addr %s114, 8
          %s116 = scalar_lea.vmem [#allocation2], %s115
          %s117 = smul.u32 2, %s14
          %s119 = ssub.s32 128, 128
          %120 = vsyncadd %s113, %s119
          %s121 = smul.addr %s117, 64
          %s122 = scalar_lea.hbm %s0, %s121
          %s124 = sshll.u32 %s116, 4
          %s125 = int_to_ptr.vmem [resolvable:$true] %s124
          %127 = dma.hbm_to_vmem [thread:$0]  %s122, 128, %s125, %s113
        $region24: #{tpu_custom_call.1} parent=19 // pred_fallthru
          _
      $region20: #{tpu_custom_call.1} parent=5 // pred_fallthru
        _
      %p128 = scmp.le.s32.totalorder 1, %s14
      %p129 = scmp.lt.s32.totalorder %s14, 9
      %p130 = pnand %p128, %p129
      %p131 = pneg %p130
      // Predicated region
      $region25: #{tpu_custom_call.1} parent=5 // pred_check
        _
      $region26: #{tpu_custom_call.1} parent=5 // pred_check_branch
        %133 = sbr.rel (%p130) target = $region28
      $region27: #{tpu_custom_call.1} parent=5 // pred_region
        %s134 = ssub.s32 %s14, 1
        %s135 = sand.u32 %s27, 1
        %s136 = scalar_lea.sflag [#allocation3], %s135
        %s137 = sand.u32 %s27, 1
        %s138 = smul.addr %s137, 8
        %s139 = scalar_lea.vmem [#allocation2], %s138
        // Predicated region
        $region29: #{tpu_custom_call.1} parent=27 // pred_check
          %p140 = pneg %p40
        $region30: #{tpu_custom_call.1} parent=27 // pred_check_branch
          %142 = sbr.rel (%p140) target = $region32
        $region31: #{tpu_custom_call.1} parent=27 // pred_region
          %143 = dma.done %s136, 128
        $region32: #{tpu_custom_call.1} parent=27 // pred_fallthru
          _
        %s144 = sand.u32 %s27, 1
        %s145 = scalar_lea.sflag [#allocation3], %s144
        %s146 = sand.u32 %s27, 1
        %s147 = smul.addr %s146, 8
        %s148 = scalar_lea.vmem [#allocation2], %s147
        %p149 = pneg %p40
        %p150 = pneg %p37
        %p151 = pneg %p61
        %p152 = pneg %p58
        %p153 = pneg %p87
        %p154 = pneg %p84
        %s155 = sand.u32 %s74, 1
        %s156 = scalar_lea.sflag [#allocation4], %s155
        %s157 = sand.u32 %s74, 1
        %s158 = smul.addr %s157, 64
        %s159 = scalar_lea.vmem [#allocation5], %s158
        %s160 = smul.u32 2, %s19
        %s161 = smul.u32 2, %s19
        %v162 = vld [vmem:[%s1] sm:$0xff]
        %v163 = vld [vmem:[%s1 + $0x8] sm:$0xff]
        %v164 = vld [vmem:[%s1 + $0x10] sm:$0xff]
        %v165 = vld [vmem:[%s1 + $0x18] sm:$0xff]
        %v166 = vlaneseq
        %v167 = vshrl.u32 %v166, 7
        %v168 = vld [vmem:[%s139] ss:$4 sm:$0x3]
        %v169 = vlaneseq
        %v170 = vshrl.u32 %v169, 7
        %v171 = vsub.s32 0, %v170
        %v172 = vrot.slane %v168, %v171
        %v173 = vlaneseq
        %v174 = vshrl.u32 %v173, 7
        %v175 = vsub.s32 1, %v174
        %v176 = vrot.slane %v168, %v175
        %vm177 = vcmp.eq.s32.totalorder %v172, %v167
        %vm178 = vcmp.eq.s32.totalorder %v176, %v167
        %v179 = vsel %vm177, 1, 0
        %v180 = vsel %vm178, 1, 0
        %v181 = vcvt.s32.f32 %v179
        %v182 = vcvt.s32.f32 %v180
        %s183 = scalar_lea.vmem %s139, 1 [#allocation2]
        %v184 = vld [vmem:[%s183] ss:$4 sm:$0x3]
        %v185 = vlaneseq
        %v186 = vshrl.u32 %v185, 7
        %v187 = vsub.s32 0, %v186
        %v188 = vrot.slane %v184, %v187
        %v189 = vlaneseq
        %v190 = vshrl.u32 %v189, 7
        %v191 = vsub.s32 1, %v190
        %v192 = vrot.slane %v184, %v191
        %vm193 = vcmp.eq.s32.totalorder %v188, %v167
        %vm194 = vcmp.eq.s32.totalorder %v192, %v167
        %v195 = vsel %vm193, 1, 0
        %v196 = vsel %vm194, 1, 0
        %v197 = vcvt.s32.f32 %v195
        %v198 = vcvt.s32.f32 %v196
        %s199 = scalar_lea.vmem %s139, 2 [#allocation2]
        %v200 = vld [vmem:[%s199] ss:$4 sm:$0x3]
        %v201 = vlaneseq
        %v202 = vshrl.u32 %v201, 7
        %v203 = vsub.s32 0, %v202
        %v204 = vrot.slane %v200, %v203
        %v205 = vlaneseq
        %v206 = vshrl.u32 %v205, 7
        %v207 = vsub.s32 1, %v206
        %v208 = vrot.slane %v200, %v207
        %vm209 = vcmp.eq.s32.totalorder %v204, %v167
        %vm210 = vcmp.eq.s32.totalorder %v208, %v167
        %v211 = vsel %vm209, 1, 0
        %v212 = vsel %vm210, 1, 0
        %v213 = vcvt.s32.f32 %v211
        %v214 = vcvt.s32.f32 %v212
        %vm215 = vcmask 195584
        %v217 = vsel %vm215, %v162, 0
        %v220 = vsel %vm215, %v163, 0
        %v223 = vsel %vm215, %v164, 0
        %v226 = vsel %vm215, %v165, 0
        %228 = vmatprep.subr.mxu0 0.0
        %229 = vmatpush1.msra.mxu0 0.0
        %230 = vmatprep.subr.mxu0 0.0
        %231 = vmatpush1.msra.mxu0 0.0
        %232 = vmatprep.subr.mxu0 0.0
        %233 = vmatpush1.msra.mxu0 0.0
        %234 = vmatprep.subr.mxu0 0.0
        %235 = vmatpush1.msra.mxu0 0.0
        %236 = vmatprep.subr.mxu0 0.0
        %237 = vmatpush1.msra.mxu0 0.0
        %238 = vmatprep.subr.mxu0 0.0
        %239 = vmatpush1.msra.mxu0 0.0
        %240 = vmatprep.subr.mxu0 0.0
        %241 = vmatpush1.msra.mxu0 0.0
        %242 = vmatprep.subr.mxu0 0.0
        %243 = vmatpush1.msra.mxu0 0.0
        %244 = vmatprep.subr.mxu0 0.0
        %245 = vmatpush1.msra.mxu0 0.0
        %246 = vmatprep.subr.mxu0 0.0
        %247 = vmatpush1.msra.mxu0 0.0
        %248 = vmatprep.subr.mxu0 0.0
        %249 = vmatpush1.msra.mxu0 0.0
        %250 = vmatprep.subr.mxu0 0.0
        %251 = vmatpush1.msra.mxu0 0.0
        %252 = vmatprep.subr.mxu0 0.0
        %253 = vmatpush1.msra.mxu0 0.0
        %254 = vmatprep.subr.mxu0 %v214
        %255 = vmatpush1.msra.mxu0 %v213
        %256 = vmatprep.subr.mxu0 %v198
        %257 = vmatpush1.msra.mxu0 %v197
        %258 = vmatprep.subr.mxu0 %v182
        %259 = vmatpush1.msra.mxu0 %v181
        %260 = vmatprep.subr.mxu0 0.0
        %261 = vmatpush2.msra.mxu0 0.0
        %262 = vmatprep.subr.mxu0 0.0
        %263 = vmatpush2.msra.mxu0 0.0
        %264 = vmatprep.subr.mxu0 0.0
        %265 = vmatpush2.msra.mxu0 0.0
        %266 = vmatprep.subr.mxu0 0.0
        %267 = vmatpush2.msra.mxu0 0.0
        %268 = vmatprep.subr.mxu0 0.0
        %269 = vmatpush2.msra.mxu0 0.0
        %270 = vmatprep.subr.mxu0 0.0
        %271 = vmatpush2.msra.mxu0 0.0
        %272 = vmatprep.subr.mxu0 0.0
        %273 = vmatpush2.msra.mxu0 0.0
        %274 = vmatprep.subr.mxu0 0.0
        %275 = vmatpush2.msra.mxu0 0.0
        %276 = vmatprep.subr.mxu0 0.0
        %277 = vmatpush2.msra.mxu0 0.0
        %278 = vmatprep.subr.mxu0 0.0
        %279 = vmatpush2.msra.mxu0 0.0
        %280 = vmatprep.subr.mxu0 0.0
        %281 = vmatpush2.msra.mxu0 0.0
        %282 = vmatprep.subr.mxu0 0.0
        %283 = vmatpush2.msra.mxu0 0.0
        %284 = vmatprep.subr.mxu0 0.0
        %285 = vmatpush2.msra.mxu0 0.0
        %286 = vmatprep.subr.mxu0 0.0
        %287 = vmatpush2.msra.mxu0 0.0
        %288 = vmatprep.subr.mxu0 0.0
        %289 = vmatpush2.msra.mxu0 0.0
        %290 = vmatprep.subr.mxu0 0.0
        %291 = vmatpush2.msra.mxu0 0.0
        %292 = vmatprep.mubr.f32.mxu0 0.0
        %293 = vmatmul.mubr.f32.gmra.mxu0 %v217
        %v294 = vpop.f32.mrf.mxu0
        %v295 = vadd.f32 0.0, %v294
        %v296 = vpop.f32.mrf.mxu0
        %v297 = vadd.f32 0.0, %v296
        %298 = vmatprep.mubr.f32.mxu0 0.0
        %299 = vmatmul.mubr.f32.gmra.mxu0 %v220
        %v300 = vpop.f32.mrf.mxu0
        %v301 = vadd.f32 0.0, %v300
        %v302 = vpop.f32.mrf.mxu0
        %v303 = vadd.f32 0.0, %v302
        %304 = vmatprep.mubr.f32.mxu0 0.0
        %305 = vmatmul.mubr.f32.gmra.mxu0 %v223
        %v306 = vpop.f32.mrf.mxu0
        %v307 = vadd.f32 0.0, %v306
        %v308 = vpop.f32.mrf.mxu0
        %v309 = vadd.f32 0.0, %v308
        %310 = vmatprep.mubr.f32.mxu0 0.0
        %311 = vmatmul.mubr.f32.gmra.mxu0 %v226
        %v312 = vpop.f32.mrf.mxu0
        %v313 = vadd.f32 0.0, %v312
        %v314 = vpop.f32.mrf.mxu0
        %v315 = vadd.f32 0.0, %v314
        %316 = vdwg.mxu0
        %317 = vst [vmem:[%s159] sm:$0xff] %v295
        %318 = vst [vmem:[%s159 + $0x8] sm:$0xff] %v297
        %319 = vst [vmem:[%s159 + $0x10] sm:$0xff] %v301
        %320 = vst [vmem:[%s159 + $0x18] sm:$0xff] %v303
        %321 = vst [vmem:[%s159 + $0x20] sm:$0xff] %v307
        %322 = vst [vmem:[%s159 + $0x28] sm:$0xff] %v309
        %323 = vst [vmem:[%s159 + $0x30] sm:$0xff] %v313
        %324 = vst [vmem:[%s159 + $0x38] sm:$0xff] %v315
        %s325 = sand.u32 %s74, 1
        %s326 = scalar_lea.sflag [#allocation4], %s325
        %s327 = sand.u32 %s74, 1
        %s328 = smul.addr %s327, 64
        %s329 = scalar_lea.vmem [#allocation5], %s328
        // Predicated region
        $region33: #{tpu_custom_call.1} parent=27 // pred_check
          %p330 = pneg %p84
        $region34: #{tpu_custom_call.1} parent=27 // pred_check_branch
          %332 = sbr.rel (%p330) target = $region36
        $region35: #{tpu_custom_call.1} parent=27 // pred_region
          %s333 = smul.u32 2, %s19
          %s335 = ssub.s32 1024, 1024
          %336 = vsyncadd %s326, %s335
          %s337 = smul.addr %s333, 128
          %s338 = scalar_lea.hbm %s2, %s337
          %s339 = sshll.u32 %s329, 4
          %s340 = int_to_ptr.vmem [resolvable:$true] %s339
          %345 = dma.vmem_to_hbm [thread:$0]  %s340, 1024, %s338, %s326, 256, 2048, 16
        $region36: #{tpu_custom_call.1} parent=27 // pred_fallthru
          _
      $region28: #{tpu_custom_call.1} parent=5 // pred_fallthru
        _
      %p346 = scmp.le.s32.totalorder 2, %s14
      // Predicated region
      $region37: #{tpu_custom_call.1} parent=5 // pred_check
        %p347 = pneg %p346
      $region38: #{tpu_custom_call.1} parent=5 // pred_check_branch
        %349 = sbr.rel (%p347) target = $region40
      $region39: #{tpu_custom_call.1} parent=5 // pred_region
        %s350 = ssub.s32 %s14, 2
        // Predicated region
        $region41: #{tpu_custom_call.1} parent=39 // pred_check
          %p351 = pneg %p90
        $region42: #{tpu_custom_call.1} parent=39 // pred_check_branch
          %353 = sbr.rel (%p351) target = $region44
        $region43: #{tpu_custom_call.1} parent=39 // pred_region
          %s354 = sand.u32 %s75, 1
          %s355 = scalar_lea.sflag [#allocation4], %s354
          %s356 = sand.u32 %s75, 1
          %s357 = smul.addr %s356, 64
          %s358 = scalar_lea.vmem [#allocation5], %s357
          %359 = dma.done %s355, 1024
        $region44: #{tpu_custom_call.1} parent=39 // pred_fallthru
          _
      $region40: #{tpu_custom_call.1} parent=5 // pred_fallthru
        _
    $region6: #{tpu_custom_call.1} parent=1 // loop_footer
      %s18 = sadd.s32 1, %s14
    $region7: #{tpu_custom_call.1} parent=1 // loop_footer_branch
      %13 = sbr.rel target = $region3
    $region8: #{tpu_custom_call.1} parent=1 // loop_exit
      _
    %360 = vsyncpa [#allocation3], 1
    %s361 = scalar_lea.sflag [#allocation3], 1
    %362 = vsyncpa %s361, 1
    %363 = vsyncpa [#allocation4], 1
    %s364 = scalar_lea.sflag [#allocation4], 1
    %365 = vsyncpa %s364, 1

</llo_original>
